<compile_context>
chip_gen: v7x
topology: tpu7x:2x2x1
jax: 0.10.0
libtpu: 0.0.40
codegen_flags: <defaults>
</compile_context>

<pallas_src>
import functools

import numpy as np
import jax
import jax.numpy as jnp
from jax import lax
from jax.experimental import pallas as pl
from jax.experimental.pallas import tpu as pltpu


def _round_up(x, m):
    return (x + m - 1) // m * m


def rc_kernel(u_ref, wpack_ref, out_ref, *, T, lr):
    """Entire ESN forward in one invocation (no grid).

    u_ref     : (T, B_pad, P)  time-major, tile-padded input; lane F holds 1.0
                               for real batch rows (bias lane), 0.0 elsewhere.
    wpack_ref : (4, P, P)      packed weights:
                               [0] Win (with reservoir bias b in row F)
                               [1] W   (recurrent, zero-padded)
                               [2] Wout (readout, zero-padded)
                               [3] row 0 = bout, rest zero
    out_ref   : (B_pad, P)     lane-dense logits tile
    """
    _, B_pad, P = u_ref.shape

    win = wpack_ref[0]                      # (P, P), bias folded in row F
    w = wpack_ref[1]                        # (P, P)
    wout = wpack_ref[2]                     # (P, P)
    bout = wpack_ref[3][0:1, :]             # (1, P)

    # ---- Hoisted input projection + bias for ALL time steps: one MXU matmul.
    u2d = u_ref[...].reshape(T * B_pad, P)                         # tile-aligned
    uproj = jnp.dot(u2d, win, preferred_element_type=jnp.float32)  # (T*B_pad, P)

    s = jnp.zeros((B_pad, P), jnp.float32)

    # ---- Recurrence: T is small & static -> fully unrolled at trace time.
    # One s @ W MXU call per step (loop-invariant RHS); leak/tanh on VPU/EUP.
    for t in range(T):
        pre = uproj[t * B_pad:(t + 1) * B_pad] + jnp.dot(
            s, w, preferred_element_type=jnp.float32)
        s = (1.0 - lr) * s + lr * jnp.tanh(pre)

    # ---- Readout on padded, lane-dense weights (unmasked (8,128) store).
    out_ref[...] = (jnp.dot(s, wout, preferred_element_type=jnp.float32)
                    + bout)


def prepare_params(win, w, b, wout, bout):
    """One-time padding + packing of all weights into a single (4, P, P) stack.

    Zero-padding keeps the math exact: padded feature rows of Win, padded
    rows/cols of W, padded readout entries are all zero, so padded state
    lanes stay identically zero and padded outputs are sliced away.
    """
    F, N = win.shape
    n_out = wout.shape[1]
    P = max(_round_up(F + 1, 128),          # +1 row for the folded bias
            _round_up(N, 128),
            _round_up(n_out, 128))

    f32 = jnp.float32
    win_p = jnp.zeros((P, P), f32)
    win_p = win_p.at[:F, :N].set(win.astype(f32))
    win_p = win_p.at[F, :N].set(b.astype(f32).reshape(N))   # bias row (lane F of u is 1.0)

    w_p = jnp.zeros((P, P), f32).at[:N, :N].set(w.astype(f32))
    wout_p = jnp.zeros((P, P), f32).at[:N, :n_out].set(wout.astype(f32))
    bout_p = jnp.zeros((P, P), f32).at[0, :n_out].set(bout.astype(f32).reshape(n_out))

    wpack = jnp.stack([win_p, w_p, wout_p, bout_p], axis=0)   # (4, P, P)
    return jax.block_until_ready(wpack)


@functools.partial(jax.jit, static_argnames=("lr", "feat", "n_out"))
def rc_model_forward(x, wpack, *, lr, feat, n_out):
    """x: [B, 1, T, F] (channel squeezed as in the PyTorch module)."""
    B, C, T, F = x.shape
    assert C == 1 and F == feat
    P = wpack.shape[1]
    B_pad = _round_up(max(B, 8), 8)         # sublane tile

    # Time-major, tile-padded input [T, B_pad, P] with the bias lane (= lane F)
    # set to 1.0 only for real batch rows; padded rows stay all-zero.
    u = jnp.transpose(x[:, 0, :, :], (1, 0, 2)).astype(jnp.float32)   # (T, B, F)
    u = jnp.pad(u, ((0, 0), (0, 0), (0, P - F)))
    u = u.at[:, :, F].set(1.0)
    u = jnp.pad(u, ((0, 0), (0, B_pad - B), (0, 0)))                  # (T, B_pad, P)

    kernel = functools.partial(rc_kernel, T=T, lr=lr)
    vmem = pl.BlockSpec(memory_space=pltpu.MemorySpace.VMEM)  # whole array in VMEM
    out = pl.pallas_call(
        kernel,
        out_shape=jax.ShapeDtypeStruct((B_pad, P), jnp.float32),
        in_specs=[vmem, vmem],
        out_specs=vmem,
    )(u, wpack)
    return out[:B, :n_out]


def rc_model_reference(x, win, w, b, wout, bout, *, lr):
    """Pure-JAX reference of the same forward pass (sanity check)."""
    u = jnp.transpose(x[:, 0, :, :], (1, 0, 2)).astype(jnp.float32)  # [T, B, F]
    B = x.shape[0]
    N = w.shape[0]

    def step(s, u_t):
        pre = u_t @ win + s @ w + b
        s_new = (1.0 - lr) * s + lr * jnp.tanh(pre)
        return s_new, None

    s0 = jnp.zeros((B, N), jnp.float32)
    s_last, _ = lax.scan(step, s0, u)
    return s_last @ wout + bout


def init_params(key, feat, res_unit, n_out, sr):
    """Deterministic reservoir + readout parameter init (synthetic)."""
    k_win, k_w, k_b, k_wo, k_bo = jax.random.split(key, 5)
    win = jax.random.uniform(k_win, (feat, res_unit), jnp.float32, -1.0, 1.0)
    w_raw = jax.random.normal(k_w, (res_unit, res_unit), jnp.float32)
    # Init-time glue: scale recurrent matrix to the requested spectral radius.
    rho = float(np.max(np.abs(np.linalg.eigvals(np.asarray(w_raw)))))
    w = w_raw * (sr / rho)
    b = jax.random.uniform(k_b, (1, res_unit), jnp.float32, -1.0, 1.0)
    # nn.Linear(res_unit, 10)-style init
    bound = 1.0 / np.sqrt(res_unit)
    wout = jax.random.uniform(k_wo, (res_unit, n_out), jnp.float32, -bound, bound)
    bout = jax.random.uniform(k_bo, (1, n_out), jnp.float32, -bound, bound)
    return win, w, b, wout, bout


if __name__ == "__main__":
    # Small shapes consistent with the module's forward:
    #   x: [batch, channel=1, time_steps, feature_size]
    B, T, F = 2, 8, 16
    RES_UNIT = 32
    N_OUT = 10
    LR = 0.3   # leak rate (`ler`)
    SR = 0.9   # spectral radius (`sr`)

    key = jax.random.PRNGKey(0)
    k_x, k_p = jax.random.split(key)
    x = jax.random.normal(k_x, (B, 1, T, F), jnp.float32)
    win, w, b, wout, bout = init_params(k_p, F, RES_UNIT, N_OUT, SR)

    # One-time (cached) padding + packing of all weights.
    wpack = prepare_params(win, w, b, wout, bout)

    out = rc_model_forward(x, wpack, lr=LR, feat=F, n_out=N_OUT)
    out = jax.block_until_ready(out)

    ref = rc_model_reference(x, win, w, b, wout, bout, lr=LR)
    np.testing.assert_allclose(np.asarray(out), np.asarray(ref),
                               rtol=1e-4, atol=1e-4)
    assert out.shape == (B, N_OUT)
    print("KERNEL_OK")
</pallas_src>

<mosaic_0001>
module attributes {stable_mosaic.version = 11 : i64} {
  func.func @rc_kernel(%arg0: memref<8x8x128xf32, #tpu.memory_space<vmem>>, %arg1: memref<4x128x128xf32, #tpu.memory_space<vmem>>, %arg2: memref<8x128xf32, #tpu.memory_space<vmem>>) attributes {dimension_semantics = [], scalar_prefetch = 0 : i64, scratch_operands = 0 : i64, tpu.core_type = #tpu.core_type<tc>} {
    %c0 = arith.constant 0 : index
    %c0_0 = arith.constant 0 : index
    %c0_1 = arith.constant 0 : index
    %0 = vector.load %arg1[%c0, %c0_0, %c0_1] : memref<4x128x128xf32, #tpu.memory_space<vmem>>, vector<1x128x128xf32>
    %1 = vector.shape_cast %0 : vector<1x128x128xf32> to vector<128x128xf32>
    %c1 = arith.constant 1 : index
    %c0_2 = arith.constant 0 : index
    %c0_3 = arith.constant 0 : index
    %2 = vector.load %arg1[%c1, %c0_2, %c0_3] : memref<4x128x128xf32, #tpu.memory_space<vmem>>, vector<1x128x128xf32>
    %3 = vector.shape_cast %2 : vector<1x128x128xf32> to vector<128x128xf32>
    %c2 = arith.constant 2 : index
    %c0_4 = arith.constant 0 : index
    %c0_5 = arith.constant 0 : index
    %4 = vector.load %arg1[%c2, %c0_4, %c0_5] : memref<4x128x128xf32, #tpu.memory_space<vmem>>, vector<1x128x128xf32>
    %5 = vector.shape_cast %4 : vector<1x128x128xf32> to vector<128x128xf32>
    %c3 = arith.constant 3 : index
    %c0_6 = arith.constant 0 : index
    %c0_7 = arith.constant 0 : index
    %6 = vector.load %arg1[%c3, %c0_6, %c0_7] : memref<4x128x128xf32, #tpu.memory_space<vmem>>, vector<1x128x128xf32>
    %7 = vector.shape_cast %6 : vector<1x128x128xf32> to vector<128x128xf32>
    %8 = vector.extract_strided_slice %7 {offsets = [0, 0], sizes = [1, 128], strides = [1, 1]} : vector<128x128xf32> to vector<1x128xf32>
    %c0_8 = arith.constant 0 : index
    %c0_9 = arith.constant 0 : index
    %c0_10 = arith.constant 0 : index
    %9 = vector.load %arg0[%c0_8, %c0_9, %c0_10] : memref<8x8x128xf32, #tpu.memory_space<vmem>>, vector<8x8x128xf32>
    %10 = vector.shape_cast %9 : vector<8x8x128xf32> to vector<64x128xf32>
    %cst = arith.constant dense<0.000000e+00> : vector<64x128xf32>
    %11 = tpu.matmul %10, %1, %cst {dimension_numbers = #tpu.dot_dimension_numbers<[1], [0], [0], [1], [0, 0, 1, 1], [], []>} : vector<64x128xf32>, vector<128x128xf32>, vector<64x128xf32> -> vector<64x128xf32>
    %cst_11 = arith.constant 0.000000e+00 : f32
    %12 = vector.broadcast %cst_11 : f32 to vector<8x128xf32>
    %13 = vector.extract_strided_slice %11 {offsets = [0, 0], sizes = [8, 128], strides = [1, 1]} : vector<64x128xf32> to vector<8x128xf32>
    %cst_12 = arith.constant dense<0.000000e+00> : vector<8x128xf32>
    %14 = tpu.matmul %12, %3, %cst_12 {dimension_numbers = #tpu.dot_dimension_numbers<[1], [0], [0], [1], [0, 0, 1, 1], [], []>} : vector<8x128xf32>, vector<128x128xf32>, vector<8x128xf32> -> vector<8x128xf32>
    %15 = arith.addf %13, %14 : vector<8x128xf32>
    %cst_13 = arith.constant 0.699999988 : f32
    %16 = vector.broadcast %cst_13 : f32 to vector<8x128xf32>
    %17 = arith.mulf %16, %12 : vector<8x128xf32>
    %18 = math.tanh %15 : vector<8x128xf32>
    %cst_14 = arith.constant 3.000000e-01 : f32
    %19 = vector.broadcast %cst_14 : f32 to vector<8x128xf32>
    %20 = arith.mulf %19, %18 : vector<8x128xf32>
    %21 = arith.addf %17, %20 : vector<8x128xf32>
    %22 = vector.extract_strided_slice %11 {offsets = [8, 0], sizes = [8, 128], strides = [1, 1]} : vector<64x128xf32> to vector<8x128xf32>
    %cst_15 = arith.constant dense<0.000000e+00> : vector<8x128xf32>
    %23 = tpu.matmul %21, %3, %cst_15 {dimension_numbers = #tpu.dot_dimension_numbers<[1], [0], [0], [1], [0, 0, 1, 1], [], []>} : vector<8x128xf32>, vector<128x128xf32>, vector<8x128xf32> -> vector<8x128xf32>
    %24 = arith.addf %22, %23 : vector<8x128xf32>
    %cst_16 = arith.constant 0.699999988 : f32
    %25 = vector.broadcast %cst_16 : f32 to vector<8x128xf32>
    %26 = arith.mulf %25, %21 : vector<8x128xf32>
    %27 = math.tanh %24 : vector<8x128xf32>
    %cst_17 = arith.constant 3.000000e-01 : f32
    %28 = vector.broadcast %cst_17 : f32 to vector<8x128xf32>
    %29 = arith.mulf %28, %27 : vector<8x128xf32>
    %30 = arith.addf %26, %29 : vector<8x128xf32>
    %31 = vector.extract_strided_slice %11 {offsets = [16, 0], sizes = [8, 128], strides = [1, 1]} : vector<64x128xf32> to vector<8x128xf32>
    %cst_18 = arith.constant dense<0.000000e+00> : vector<8x128xf32>
    %32 = tpu.matmul %30, %3, %cst_18 {dimension_numbers = #tpu.dot_dimension_numbers<[1], [0], [0], [1], [0, 0, 1, 1], [], []>} : vector<8x128xf32>, vector<128x128xf32>, vector<8x128xf32> -> vector<8x128xf32>
    %33 = arith.addf %31, %32 : vector<8x128xf32>
    %cst_19 = arith.constant 0.699999988 : f32
    %34 = vector.broadcast %cst_19 : f32 to vector<8x128xf32>
    %35 = arith.mulf %34, %30 : vector<8x128xf32>
    %36 = math.tanh %33 : vector<8x128xf32>
    %cst_20 = arith.constant 3.000000e-01 : f32
    %37 = vector.broadcast %cst_20 : f32 to vector<8x128xf32>
    %38 = arith.mulf %37, %36 : vector<8x128xf32>
    %39 = arith.addf %35, %38 : vector<8x128xf32>
    %40 = vector.extract_strided_slice %11 {offsets = [24, 0], sizes = [8, 128], strides = [1, 1]} : vector<64x128xf32> to vector<8x128xf32>
    %cst_21 = arith.constant dense<0.000000e+00> : vector<8x128xf32>
    %41 = tpu.matmul %39, %3, %cst_21 {dimension_numbers = #tpu.dot_dimension_numbers<[1], [0], [0], [1], [0, 0, 1, 1], [], []>} : vector<8x128xf32>, vector<128x128xf32>, vector<8x128xf32> -> vector<8x128xf32>
    %42 = arith.addf %40, %41 : vector<8x128xf32>
    %cst_22 = arith.constant 0.699999988 : f32
    %43 = vector.broadcast %cst_22 : f32 to vector<8x128xf32>
    %44 = arith.mulf %43, %39 : vector<8x128xf32>
    %45 = math.tanh %42 : vector<8x128xf32>
    %cst_23 = arith.constant 3.000000e-01 : f32
    %46 = vector.broadcast %cst_23 : f32 to vector<8x128xf32>
    %47 = arith.mulf %46, %45 : vector<8x128xf32>
    %48 = arith.addf %44, %47 : vector<8x128xf32>
    %49 = vector.extract_strided_slice %11 {offsets = [32, 0], sizes = [8, 128], strides = [1, 1]} : vector<64x128xf32> to vector<8x128xf32>
    %cst_24 = arith.constant dense<0.000000e+00> : vector<8x128xf32>
    %50 = tpu.matmul %48, %3, %cst_24 {dimension_numbers = #tpu.dot_dimension_numbers<[1], [0], [0], [1], [0, 0, 1, 1], [], []>} : vector<8x128xf32>, vector<128x128xf32>, vector<8x128xf32> -> vector<8x128xf32>
    %51 = arith.addf %49, %50 : vector<8x128xf32>
    %cst_25 = arith.constant 0.699999988 : f32
    %52 = vector.broadcast %cst_25 : f32 to vector<8x128xf32>
    %53 = arith.mulf %52, %48 : vector<8x128xf32>
    %54 = math.tanh %51 : vector<8x128xf32>
    %cst_26 = arith.constant 3.000000e-01 : f32
    %55 = vector.broadcast %cst_26 : f32 to vector<8x128xf32>
    %56 = arith.mulf %55, %54 : vector<8x128xf32>
    %57 = arith.addf %53, %56 : vector<8x128xf32>
    %58 = vector.extract_strided_slice %11 {offsets = [40, 0], sizes = [8, 128], strides = [1, 1]} : vector<64x128xf32> to vector<8x128xf32>
    %cst_27 = arith.constant dense<0.000000e+00> : vector<8x128xf32>
    %59 = tpu.matmul %57, %3, %cst_27 {dimension_numbers = #tpu.dot_dimension_numbers<[1], [0], [0], [1], [0, 0, 1, 1], [], []>} : vector<8x128xf32>, vector<128x128xf32>, vector<8x128xf32> -> vector<8x128xf32>
    %60 = arith.addf %58, %59 : vector<8x128xf32>
    %cst_28 = arith.constant 0.699999988 : f32
    %61 = vector.broadcast %cst_28 : f32 to vector<8x128xf32>
    %62 = arith.mulf %61, %57 : vector<8x128xf32>
    %63 = math.tanh %60 : vector<8x128xf32>
    %cst_29 = arith.constant 3.000000e-01 : f32
    %64 = vector.broadcast %cst_29 : f32 to vector<8x128xf32>
    %65 = arith.mulf %64, %63 : vector<8x128xf32>
    %66 = arith.addf %62, %65 : vector<8x128xf32>
    %67 = vector.extract_strided_slice %11 {offsets = [48, 0], sizes = [8, 128], strides = [1, 1]} : vector<64x128xf32> to vector<8x128xf32>
    %cst_30 = arith.constant dense<0.000000e+00> : vector<8x128xf32>
    %68 = tpu.matmul %66, %3, %cst_30 {dimension_numbers = #tpu.dot_dimension_numbers<[1], [0], [0], [1], [0, 0, 1, 1], [], []>} : vector<8x128xf32>, vector<128x128xf32>, vector<8x128xf32> -> vector<8x128xf32>
    %69 = arith.addf %67, %68 : vector<8x128xf32>
    %cst_31 = arith.constant 0.699999988 : f32
    %70 = vector.broadcast %cst_31 : f32 to vector<8x128xf32>
    %71 = arith.mulf %70, %66 : vector<8x128xf32>
    %72 = math.tanh %69 : vector<8x128xf32>
    %cst_32 = arith.constant 3.000000e-01 : f32
    %73 = vector.broadcast %cst_32 : f32 to vector<8x128xf32>
    %74 = arith.mulf %73, %72 : vector<8x128xf32>
    %75 = arith.addf %71, %74 : vector<8x128xf32>
    %76 = vector.extract_strided_slice %11 {offsets = [56, 0], sizes = [8, 128], strides = [1, 1]} : vector<64x128xf32> to vector<8x128xf32>
    %cst_33 = arith.constant dense<0.000000e+00> : vector<8x128xf32>
    %77 = tpu.matmul %75, %3, %cst_33 {dimension_numbers = #tpu.dot_dimension_numbers<[1], [0], [0], [1], [0, 0, 1, 1], [], []>} : vector<8x128xf32>, vector<128x128xf32>, vector<8x128xf32> -> vector<8x128xf32>
    %78 = arith.addf %76, %77 : vector<8x128xf32>
    %cst_34 = arith.constant 0.699999988 : f32
    %79 = vector.broadcast %cst_34 : f32 to vector<8x128xf32>
    %80 = arith.mulf %79, %75 : vector<8x128xf32>
    %81 = math.tanh %78 : vector<8x128xf32>
    %cst_35 = arith.constant 3.000000e-01 : f32
    %82 = vector.broadcast %cst_35 : f32 to vector<8x128xf32>
    %83 = arith.mulf %82, %81 : vector<8x128xf32>
    %84 = arith.addf %80, %83 : vector<8x128xf32>
    %cst_36 = arith.constant dense<0.000000e+00> : vector<8x128xf32>
    %85 = tpu.matmul %84, %5, %cst_36 {dimension_numbers = #tpu.dot_dimension_numbers<[1], [0], [0], [1], [0, 0, 1, 1], [], []>} : vector<8x128xf32>, vector<128x128xf32>, vector<8x128xf32> -> vector<8x128xf32>
    %86 = vector.broadcast %8 : vector<1x128xf32> to vector<8x128xf32>
    %87 = arith.addf %85, %86 : vector<8x128xf32>
    %c0_37 = arith.constant 0 : index
    %c0_38 = arith.constant 0 : index
    %88 = vector.load %arg2[%c0_37, %c0_38] : memref<8x128xf32, #tpu.memory_space<vmem>>, vector<8x128xf32>
    tpu.vector_store %arg2[%c0_37, %c0_38], %87 {strides = array<i32>} : memref<8x128xf32, #tpu.memory_space<vmem>>, vector<8x128xf32>,
    return
  }
}

</mosaic_0001>

<llo_original>
// kernel: rc_model_forward.1
$region0: #{rc_model_forward.1}
  #allocation0 [shape = 'u32[]', space=smem, size = 0x4, offset = 0x4, fixed_abs, tag = 'smem constant byte address 0x4 - core index']
  #allocation1 [shape = 'u32[144,128]{1,0:T(1,128)}', space=vmem, size = 0x12000, scoped, tag = 'internal scratch']
  %s0 = inlined_call_operand.vmem [shape: f32[8,8,128], index: 0, kind: input, shape index: {}]
  %s1 = inlined_call_operand.hbm [shape: f32[4,128,128], index: 1, kind: input, shape index: {}]
  %s2 = inlined_call_operand.vmem [shape: f32[8,128], index: 2, kind: output, shape index: {}]
  %s3 = sld [smem:[#allocation0]]
  $region22: #{rc_model_forward.1} parent=0
    _
  %s5 = ssub.s32 1, %s3
  %s6 = scalar_select 0, %s5, %s3
  $region1: #{rc_model_forward.1} parent=0
    #allocation2 [shape = 'u8[262144]{0}', space=vmem, size = 0x40000, scoped, tag = 'input window, operand 1, single buffered']
    #allocation3 [shape = 's32[1]{0}', space=sflag, size = 0x4, scoped, tag = 'scoped memory for rc_model_forward.1']
    %7 = vsyncpa [#allocation3], 0
    // Predicated region
    $region2: #{rc_model_forward.1} parent=1 // pred_check
      _
    $region3: #{rc_model_forward.1} parent=1 // pred_check_branch
      %9 = sbr.rel (0) target = $region5
    $region4: #{rc_model_forward.1} parent=1 // pred_region
      _
    $region5: #{rc_model_forward.1} parent=1 // pred_fallthru
      _
    // Predicated region
    $region6: #{rc_model_forward.1} parent=1 // pred_check
      _
    $region7: #{rc_model_forward.1} parent=1 // pred_check_branch
      %11 = sbr.rel (0) target = $region9
    $region8: #{rc_model_forward.1} parent=1 // pred_region
      %s13 = ssub.s32 8192, 8192
      %14 = vsyncadd [#allocation3], %s13
      %s15 = sshll.u32 [#allocation2], 4
      %s16 = int_to_ptr.vmem [resolvable:$true] %s15
      %21 = dma.hbm_to_vmem [thread:$0]  %s1, 8192, %s16, [#allocation3], 128, 128, 8
    $region9: #{rc_model_forward.1} parent=1 // pred_fallthru
      _
    // Predicated region
    $region10: #{rc_model_forward.1} parent=1 // pred_check
      _
    $region11: #{rc_model_forward.1} parent=1 // pred_check_branch
      %23 = sbr.rel (0) target = $region13
    $region12: #{rc_model_forward.1} parent=1 // pred_region
      %24 = dma.done [#allocation3], 8192
    $region13: #{rc_model_forward.1} parent=1 // pred_fallthru
      _
    %v25 = vld [vmem:[#allocation2] sm:$0xff]
    %v26 = vld [vmem:[#allocation2 + $0x8] sm:$0xff]
    %v27 = vld [vmem:[#allocation2 + $0x10] sm:$0xff]
    %v28 = vld [vmem:[#allocation2 + $0x18] sm:$0xff]
    %v29 = vld [vmem:[#allocation2 + $0x20] sm:$0xff]
    %v30 = vld [vmem:[#allocation2 + $0x28] sm:$0xff]
    %v31 = vld [vmem:[#allocation2 + $0x30] sm:$0xff]
    %v32 = vld [vmem:[#allocation2 + $0x38] sm:$0xff]
    %v33 = vld [vmem:[#allocation2 + $0x40] sm:$0xff]
    %v34 = vld [vmem:[#allocation2 + $0x48] sm:$0xff]
    %v35 = vld [vmem:[#allocation2 + $0x50] sm:$0xff]
    %v36 = vld [vmem:[#allocation2 + $0x58] sm:$0xff]
    %v37 = vld [vmem:[#allocation2 + $0x60] sm:$0xff]
    %v38 = vld [vmem:[#allocation2 + $0x68] sm:$0xff]
    %v39 = vld [vmem:[#allocation2 + $0x70] sm:$0xff]
    %v40 = vld [vmem:[#allocation2 + $0x78] sm:$0xff]
    %s41 = scalar_lea.vmem [#allocation2], 128
    %v42 = vld [vmem:[%s41] sm:$0xff]
    %v43 = vld [vmem:[%s41 + $0x8] sm:$0xff]
    %v44 = vld [vmem:[%s41 + $0x10] sm:$0xff]
    %v45 = vld [vmem:[%s41 + $0x18] sm:$0xff]
    %v46 = vld [vmem:[%s41 + $0x20] sm:$0xff]
    %v47 = vld [vmem:[%s41 + $0x28] sm:$0xff]
    %v48 = vld [vmem:[%s41 + $0x30] sm:$0xff]
    %v49 = vld [vmem:[%s41 + $0x38] sm:$0xff]
    %v50 = vld [vmem:[%s41 + $0x40] sm:$0xff]
    %v51 = vld [vmem:[%s41 + $0x48] sm:$0xff]
    %v52 = vld [vmem:[%s41 + $0x50] sm:$0xff]
    %v53 = vld [vmem:[%s41 + $0x58] sm:$0xff]
    %v54 = vld [vmem:[%s41 + $0x60] sm:$0xff]
    %v55 = vld [vmem:[%s41 + $0x68] sm:$0xff]
    %v56 = vld [vmem:[%s41 + $0x70] sm:$0xff]
    %v57 = vld [vmem:[%s41 + $0x78] sm:$0xff]
    %s58 = scalar_lea.vmem [#allocation2], 256
    %v59 = vld [vmem:[%s58] sm:$0xff]
    %v60 = vld [vmem:[%s58 + $0x8] sm:$0xff]
    %v61 = vld [vmem:[%s58 + $0x10] sm:$0xff]
    %v62 = vld [vmem:[%s58 + $0x18] sm:$0xff]
    %v63 = vld [vmem:[%s58 + $0x20] sm:$0xff]
    %v64 = vld [vmem:[%s58 + $0x28] sm:$0xff]
    %v65 = vld [vmem:[%s58 + $0x30] sm:$0xff]
    %v66 = vld [vmem:[%s58 + $0x38] sm:$0xff]
    %v67 = vld [vmem:[%s58 + $0x40] sm:$0xff]
    %v68 = vld [vmem:[%s58 + $0x48] sm:$0xff]
    %v69 = vld [vmem:[%s58 + $0x50] sm:$0xff]
    %v70 = vld [vmem:[%s58 + $0x58] sm:$0xff]
    %v71 = vld [vmem:[%s58 + $0x60] sm:$0xff]
    %v72 = vld [vmem:[%s58 + $0x68] sm:$0xff]
    %v73 = vld [vmem:[%s58 + $0x70] sm:$0xff]
    %v74 = vld [vmem:[%s58 + $0x78] sm:$0xff]
    %s75 = scalar_lea.vmem [#allocation2], 384
    %v76 = vld [vmem:[%s75] sm:$0xff]
    %v77 = vld [vmem:[%s0] sm:$0xff]
    %v78 = vld [vmem:[%s0 + $0x8] sm:$0xff]
    %v79 = vld [vmem:[%s0 + $0x10] sm:$0xff]
    %v80 = vld [vmem:[%s0 + $0x18] sm:$0xff]
    %v81 = vld [vmem:[%s0 + $0x20] sm:$0xff]
    %v82 = vld [vmem:[%s0 + $0x28] sm:$0xff]
    %v83 = vld [vmem:[%s0 + $0x30] sm:$0xff]
    %v84 = vld [vmem:[%s0 + $0x38] sm:$0xff]
    %85 = vmatprep.subr.mxu0 0.0
    %86 = vmatpush1.msra.mxu0 %v25
    %87 = vmatprep.subr.mxu0 0.0
    %88 = vmatpush1.msra.mxu0 %v26
    %89 = vmatprep.subr.mxu0 0.0
    %90 = vmatpush1.msra.mxu0 %v27
    %91 = vmatprep.subr.mxu0 0.0
    %92 = vmatpush1.msra.mxu0 %v28
    %93 = vmatprep.subr.mxu0 0.0
    %94 = vmatpush1.msra.mxu0 %v29
    %95 = vmatprep.subr.mxu0 0.0
    %96 = vmatpush1.msra.mxu0 %v30
    %97 = vmatprep.subr.mxu0 0.0
    %98 = vmatpush1.msra.mxu0 %v31
    %99 = vmatprep.subr.mxu0 0.0
    %100 = vmatpush1.msra.mxu0 %v32
    %101 = vmatprep.subr.mxu0 0.0
    %102 = vmatpush1.msra.mxu0 %v33
    %103 = vmatprep.subr.mxu0 0.0
    %104 = vmatpush1.msra.mxu0 %v34
    %105 = vmatprep.subr.mxu0 0.0
    %106 = vmatpush1.msra.mxu0 %v35
    %107 = vmatprep.subr.mxu0 0.0
    %108 = vmatpush1.msra.mxu0 %v36
    %109 = vmatprep.subr.mxu0 0.0
    %110 = vmatpush1.msra.mxu0 %v37
    %111 = vmatprep.subr.mxu0 0.0
    %112 = vmatpush1.msra.mxu0 %v38
    %113 = vmatprep.subr.mxu0 0.0
    %114 = vmatpush1.msra.mxu0 %v39
    %115 = vmatprep.subr.mxu0 0.0
    %116 = vmatpush1.msra.mxu0 %v40
    %117 = vmatprep.subr.mxu0 0.0
    %118 = vmatpush1.msra.mxu0 0.0
    %119 = vmatprep.subr.mxu0 0.0
    %120 = vmatpush1.msra.mxu0 0.0
    %121 = vmatprep.subr.mxu0 0.0
    %122 = vmatpush1.msra.mxu0 0.0
    %123 = vmatprep.subr.mxu0 0.0
    %124 = vmatpush1.msra.mxu0 0.0
    %125 = vmatprep.subr.mxu0 0.0
    %126 = vmatpush1.msra.mxu0 0.0
    %127 = vmatprep.subr.mxu0 0.0
    %128 = vmatpush1.msra.mxu0 0.0
    %129 = vmatprep.subr.mxu0 0.0
    %130 = vmatpush1.msra.mxu0 0.0
    %131 = vmatprep.subr.mxu0 0.0
    %132 = vmatpush1.msra.mxu0 0.0
    %133 = vmatprep.subr.mxu0 0.0
    %134 = vmatpush1.msra.mxu0 0.0
    %135 = vmatprep.subr.mxu0 0.0
    %136 = vmatpush1.msra.mxu0 0.0
    %137 = vmatprep.subr.mxu0 0.0
    %138 = vmatpush1.msra.mxu0 0.0
    %139 = vmatprep.subr.mxu0 0.0
    %140 = vmatpush1.msra.mxu0 0.0
    %141 = vmatprep.subr.mxu0 0.0
    %142 = vmatpush1.msra.mxu0 0.0
    %143 = vmatprep.subr.mxu0 0.0
    %144 = vmatpush1.msra.mxu0 0.0
    %145 = vmatprep.subr.mxu0 0.0
    %146 = vmatpush1.msra.mxu0 0.0
    %147 = vmatprep.subr.mxu0 0.0
    %148 = vmatpush1.msra.mxu0 0.0
    %149 = vmatprep.mubr.f32.mxu0 0.0
    %150 = vmatmul.mubr.f32.gmra.mrb[0].mxu0 %v77
    %v151 = vpop.f32.mrb[0].mxu0
    %v152 = vadd.f32 0.0, %v151
    %v153 = vpop.f32.mrb[0].mxu0
    %154 = vmatprep.mubr.f32.mxu0 0.0
    %155 = vmatmul.mubr.f32.gmra.mrb[0].mxu0 %v78
    %v156 = vpop.f32.mrb[0].mxu0
    %v157 = vadd.f32 0.0, %v156
    %v158 = vpop.f32.mrb[0].mxu0
    %159 = vmatprep.mubr.f32.mxu0 0.0
    %160 = vmatmul.mubr.f32.gmra.mrb[0].mxu0 %v79
    %v161 = vpop.f32.mrb[0].mxu0
    %v162 = vadd.f32 0.0, %v161
    %v163 = vpop.f32.mrb[0].mxu0
    %164 = vmatprep.mubr.f32.mxu0 0.0
    %165 = vmatmul.mubr.f32.gmra.mrb[0].mxu0 %v80
    %v166 = vpop.f32.mrb[0].mxu0
    %v167 = vadd.f32 0.0, %v166
    %v168 = vpop.f32.mrb[0].mxu0
    %169 = vmatprep.mubr.f32.mxu0 0.0
    %170 = vmatmul.mubr.f32.gmra.mrb[0].mxu0 %v81
    %v171 = vpop.f32.mrb[0].mxu0
    %v172 = vadd.f32 0.0, %v171
    %v173 = vpop.f32.mrb[0].mxu0
    %174 = vmatprep.mubr.f32.mxu0 0.0
    %175 = vmatmul.mubr.f32.gmra.mrb[0].mxu0 %v82
    %v176 = vpop.f32.mrb[0].mxu0
    %v177 = vadd.f32 0.0, %v176
    %v178 = vpop.f32.mrb[0].mxu0
    %179 = vmatprep.mubr.f32.mxu0 0.0
    %180 = vmatmul.mubr.f32.gmra.mrb[0].mxu0 %v83
    %v181 = vpop.f32.mrb[0].mxu0
    %v182 = vadd.f32 0.0, %v181
    %v183 = vpop.f32.mrb[0].mxu0
    %184 = vmatprep.mubr.f32.mxu0 0.0
    %185 = vmatmul.mubr.f32.gmra.mrb[0].mxu0 %v84
    %v186 = vpop.f32.mrb[0].mxu0
    %v187 = vadd.f32 0.0, %v186
    %v188 = vpop.f32.mrb[0].mxu0
    %189 = vdwg.mxu0
    %190 = vmatprep.subr.mxu0 0.0
    %191 = vmatpush1.msra.mxu0 %v42
    %192 = vmatprep.subr.mxu0 0.0
    %193 = vmatpush1.msra.mxu0 %v43
    %194 = vmatprep.subr.mxu0 0.0
    %195 = vmatpush1.msra.mxu0 %v44
    %196 = vmatprep.subr.mxu0 0.0
    %197 = vmatpush1.msra.mxu0 %v45
    %198 = vmatprep.subr.mxu0 0.0
    %199 = vmatpush1.msra.mxu0 %v46
    %200 = vmatprep.subr.mxu0 0.0
    %201 = vmatpush1.msra.mxu0 %v47
    %202 = vmatprep.subr.mxu0 0.0
    %203 = vmatpush1.msra.mxu0 %v48
    %204 = vmatprep.subr.mxu0 0.0
    %205 = vmatpush1.msra.mxu0 %v49
    %206 = vmatprep.subr.mxu0 0.0
    %207 = vmatpush1.msra.mxu0 %v50
    %208 = vmatprep.subr.mxu0 0.0
    %209 = vmatpush1.msra.mxu0 %v51
    %210 = vmatprep.subr.mxu0 0.0
    %211 = vmatpush1.msra.mxu0 %v52
    %212 = vmatprep.subr.mxu0 0.0
    %213 = vmatpush1.msra.mxu0 %v53
    %214 = vmatprep.subr.mxu0 0.0
    %215 = vmatpush1.msra.mxu0 %v54
    %216 = vmatprep.subr.mxu0 0.0
    %217 = vmatpush1.msra.mxu0 %v55
    %218 = vmatprep.subr.mxu0 0.0
    %219 = vmatpush1.msra.mxu0 %v56
    %220 = vmatprep.subr.mxu0 0.0
    %221 = vmatpush1.msra.mxu0 %v57
    %222 = vmatprep.subr.mxu0 0.0
    %223 = vmatpush1.msra.mxu0 0.0
    %224 = vmatprep.subr.mxu0 0.0
    %225 = vmatpush1.msra.mxu0 0.0
    %226 = vmatprep.subr.mxu0 0.0
    %227 = vmatpush1.msra.mxu0 0.0
    %228 = vmatprep.subr.mxu0 0.0
    %229 = vmatpush1.msra.mxu0 0.0
    %230 = vmatprep.subr.mxu0 0.0
    %231 = vmatpush1.msra.mxu0 0.0
    %232 = vmatprep.subr.mxu0 0.0
    %233 = vmatpush1.msra.mxu0 0.0
    %234 = vmatprep.subr.mxu0 0.0
    %235 = vmatpush1.msra.mxu0 0.0
    %236 = vmatprep.subr.mxu0 0.0
    %237 = vmatpush1.msra.mxu0 0.0
    %238 = vmatprep.subr.mxu0 0.0
    %239 = vmatpush1.msra.mxu0 0.0
    %240 = vmatprep.subr.mxu0 0.0
    %241 = vmatpush1.msra.mxu0 0.0
    %242 = vmatprep.subr.mxu0 0.0
    %243 = vmatpush1.msra.mxu0 0.0
    %244 = vmatprep.subr.mxu0 0.0
    %245 = vmatpush1.msra.mxu0 0.0
    %246 = vmatprep.subr.mxu0 0.0
    %247 = vmatpush1.msra.mxu0 0.0
    %248 = vmatprep.subr.mxu0 0.0
    %249 = vmatpush1.msra.mxu0 0.0
    %250 = vmatprep.subr.mxu0 0.0
    %251 = vmatpush1.msra.mxu0 0.0
    %252 = vmatprep.subr.mxu0 0.0
    %253 = vmatpush1.msra.mxu0 0.0
    %254 = vmatprep.mubr.f32.mxu0 0.0
    %255 = vmatmul.mubr.f32.gmra.mrb[0].mxu0 0.0
    %v256 = vpop.f32.mrb[0].mxu0
    %v257 = vadd.f32 0.0, %v256
    %v258 = vpop.f32.mrb[0].mxu0
    %259 = vdwg.mxu0
    %v260 = vadd.f32 %v152, %v257
    %v261 = vtanh.pop %v260
    %v262 = vmul.f32 %v261, 0.3
    %v263 = vadd.f32 %v262, 0.0
    %264 = vmatprep.subr.mxu0 0.0
    %265 = vmatpush1.msra.mxu0 %v42
    %266 = vmatprep.subr.mxu0 0.0
    %267 = vmatpush1.msra.mxu0 %v43
    %268 = vmatprep.subr.mxu0 0.0
    %269 = vmatpush1.msra.mxu0 %v44
    %270 = vmatprep.subr.mxu0 0.0
    %271 = vmatpush1.msra.mxu0 %v45
    %272 = vmatprep.subr.mxu0 0.0
    %273 = vmatpush1.msra.mxu0 %v46
    %274 = vmatprep.subr.mxu0 0.0
    %275 = vmatpush1.msra.mxu0 %v47
    %276 = vmatprep.subr.mxu0 0.0
    %277 = vmatpush1.msra.mxu0 %v48
    %278 = vmatprep.subr.mxu0 0.0
    %279 = vmatpush1.msra.mxu0 %v49
    %280 = vmatprep.subr.mxu0 0.0
    %281 = vmatpush1.msra.mxu0 %v50
    %282 = vmatprep.subr.mxu0 0.0
    %283 = vmatpush1.msra.mxu0 %v51
    %284 = vmatprep.subr.mxu0 0.0
    %285 = vmatpush1.msra.mxu0 %v52
    %286 = vmatprep.subr.mxu0 0.0
    %287 = vmatpush1.msra.mxu0 %v53
    %288 = vmatprep.subr.mxu0 0.0
    %289 = vmatpush1.msra.mxu0 %v54
    %290 = vmatprep.subr.mxu0 0.0
    %291 = vmatpush1.msra.mxu0 %v55
    %292 = vmatprep.subr.mxu0 0.0
    %293 = vmatpush1.msra.mxu0 %v56
    %294 = vmatprep.subr.mxu0 0.0
    %295 = vmatpush1.msra.mxu0 %v57
    %296 = vmatprep.subr.mxu0 0.0
    %297 = vmatpush1.msra.mxu0 0.0
    %298 = vmatprep.subr.mxu0 0.0
    %299 = vmatpush1.msra.mxu0 0.0
    %300 = vmatprep.subr.mxu0 0.0
    %301 = vmatpush1.msra.mxu0 0.0
    %302 = vmatprep.subr.mxu0 0.0
    %303 = vmatpush1.msra.mxu0 0.0
    %304 = vmatprep.subr.mxu0 0.0
    %305 = vmatpush1.msra.mxu0 0.0
    %306 = vmatprep.subr.mxu0 0.0
    %307 = vmatpush1.msra.mxu0 0.0
    %308 = vmatprep.subr.mxu0 0.0
    %309 = vmatpush1.msra.mxu0 0.0
    %310 = vmatprep.subr.mxu0 0.0
    %311 = vmatpush1.msra.mxu0 0.0
    %312 = vmatprep.subr.mxu0 0.0
    %313 = vmatpush1.msra.mxu0 0.0
    %314 = vmatprep.subr.mxu0 0.0
    %315 = vmatpush1.msra.mxu0 0.0
    %316 = vmatprep.subr.mxu0 0.0
    %317 = vmatpush1.msra.mxu0 0.0
    %318 = vmatprep.subr.mxu0 0.0
    %319 = vmatpush1.msra.mxu0 0.0
    %320 = vmatprep.subr.mxu0 0.0
    %321 = vmatpush1.msra.mxu0 0.0
    %322 = vmatprep.subr.mxu0 0.0
    %323 = vmatpush1.msra.mxu0 0.0
    %324 = vmatprep.subr.mxu0 0.0
    %325 = vmatpush1.msra.mxu0 0.0
    %326 = vmatprep.subr.mxu0 0.0
    %327 = vmatpush1.msra.mxu0 0.0
    %328 = vmatprep.mubr.f32.mxu0 0.0
    %329 = vmatmul.mubr.f32.gmra.mrb[0].mxu0 %v263
    %v330 = vpop.f32.mrb[0].mxu0
    %v331 = vadd.f32 0.0, %v330
    %v332 = vpop.f32.mrb[0].mxu0
    %333 = vdwg.mxu0
    %v334 = vadd.f32 %v157, %v331
    %v335 = vmul.f32 %v263, 0.7
    %v336 = vtanh.pop %v334
    %v337 = vmul.f32 %v336, 0.3
    %v338 = vadd.f32 %v335, %v337
    %339 = vmatprep.subr.mxu0 0.0
    %340 = vmatpush1.msra.mxu0 %v42
    %341 = vmatprep.subr.mxu0 0.0
    %342 = vmatpush1.msra.mxu0 %v43
    %343 = vmatprep.subr.mxu0 0.0
    %344 = vmatpush1.msra.mxu0 %v44
    %345 = vmatprep.subr.mxu0 0.0
    %346 = vmatpush1.msra.mxu0 %v45
    %347 = vmatprep.subr.mxu0 0.0
    %348 = vmatpush1.msra.mxu0 %v46
    %349 = vmatprep.subr.mxu0 0.0
    %350 = vmatpush1.msra.mxu0 %v47
    %351 = vmatprep.subr.mxu0 0.0
    %352 = vmatpush1.msra.mxu0 %v48
    %353 = vmatprep.subr.mxu0 0.0
    %354 = vmatpush1.msra.mxu0 %v49
    %355 = vmatprep.subr.mxu0 0.0
    %356 = vmatpush1.msra.mxu0 %v50
    %357 = vmatprep.subr.mxu0 0.0
    %358 = vmatpush1.msra.mxu0 %v51
    %359 = vmatprep.subr.mxu0 0.0
    %360 = vmatpush1.msra.mxu0 %v52
    %361 = vmatprep.subr.mxu0 0.0
    %362 = vmatpush1.msra.mxu0 %v53
    %363 = vmatprep.subr.mxu0 0.0
    %364 = vmatpush1.msra.mxu0 %v54
    %365 = vmatprep.subr.mxu0 0.0
    %366 = vmatpush1.msra.mxu0 %v55
    %367 = vmatprep.subr.mxu0 0.0
    %368 = vmatpush1.msra.mxu0 %v56
    %369 = vmatprep.subr.mxu0 0.0
    %370 = vmatpush1.msra.mxu0 %v57
    %371 = vmatprep.subr.mxu0 0.0
    %372 = vmatpush1.msra.mxu0 0.0
    %373 = vmatprep.subr.mxu0 0.0
    %374 = vmatpush1.msra.mxu0 0.0
    %375 = vmatprep.subr.mxu0 0.0
    %376 = vmatpush1.msra.mxu0 0.0
    %377 = vmatprep.subr.mxu0 0.0
    %378 = vmatpush1.msra.mxu0 0.0
    %379 = vmatprep.subr.mxu0 0.0
    %380 = vmatpush1.msra.mxu0 0.0
    %381 = vmatprep.subr.mxu0 0.0
    %382 = vmatpush1.msra.mxu0 0.0
    %383 = vmatprep.subr.mxu0 0.0
    %384 = vmatpush1.msra.mxu0 0.0
    %385 = vmatprep.subr.mxu0 0.0
    %386 = vmatpush1.msra.mxu0 0.0
    %387 = vmatprep.subr.mxu0 0.0
    %388 = vmatpush1.msra.mxu0 0.0
    %389 = vmatprep.subr.mxu0 0.0
    %390 = vmatpush1.msra.mxu0 0.0
    %391 = vmatprep.subr.mxu0 0.0
    %392 = vmatpush1.msra.mxu0 0.0
    %393 = vmatprep.subr.mxu0 0.0
    %394 = vmatpush1.msra.mxu0 0.0
    %395 = vmatprep.subr.mxu0 0.0
    %396 = vmatpush1.msra.mxu0 0.0
    %397 = vmatprep.subr.mxu0 0.0
    %398 = vmatpush1.msra.mxu0 0.0
    %399 = vmatprep.subr.mxu0 0.0
    %400 = vmatpush1.msra.mxu0 0.0
    %401 = vmatprep.subr.mxu0 0.0
    %402 = vmatpush1.msra.mxu0 0.0
    %403 = vmatprep.mubr.f32.mxu0 0.0
    %404 = vmatmul.mubr.f32.gmra.mrb[0].mxu0 %v338
    %v405 = vpop.f32.mrb[0].mxu0
    %v406 = vadd.f32 0.0, %v405
    %v407 = vpop.f32.mrb[0].mxu0
    %408 = vdwg.mxu0
    %v409 = vadd.f32 %v162, %v406
    %v410 = vmul.f32 %v338, 0.7
    %v411 = vtanh.pop %v409
    %v412 = vmul.f32 %v411, 0.3
    %v413 = vadd.f32 %v410, %v412
    %414 = vmatprep.subr.mxu0 0.0
    %415 = vmatpush1.msra.mxu0 %v42
    %416 = vmatprep.subr.mxu0 0.0
    %417 = vmatpush1.msra.mxu0 %v43
    %418 = vmatprep.subr.mxu0 0.0
    %419 = vmatpush1.msra.mxu0 %v44
    %420 = vmatprep.subr.mxu0 0.0
    %421 = vmatpush1.msra.mxu0 %v45
    %422 = vmatprep.subr.mxu0 0.0
    %423 = vmatpush1.msra.mxu0 %v46
    %424 = vmatprep.subr.mxu0 0.0
    %425 = vmatpush1.msra.mxu0 %v47
    %426 = vmatprep.subr.mxu0 0.0
    %427 = vmatpush1.msra.mxu0 %v48
    %428 = vmatprep.subr.mxu0 0.0
    %429 = vmatpush1.msra.mxu0 %v49
    %430 = vmatprep.subr.mxu0 0.0
    %431 = vmatpush1.msra.mxu0 %v50
    %432 = vmatprep.subr.mxu0 0.0
    %433 = vmatpush1.msra.mxu0 %v51
    %434 = vmatprep.subr.mxu0 0.0
    %435 = vmatpush1.msra.mxu0 %v52
    %436 = vmatprep.subr.mxu0 0.0
    %437 = vmatpush1.msra.mxu0 %v53
    %438 = vmatprep.subr.mxu0 0.0
    %439 = vmatpush1.msra.mxu0 %v54
    %440 = vmatprep.subr.mxu0 0.0
    %441 = vmatpush1.msra.mxu0 %v55
    %442 = vmatprep.subr.mxu0 0.0
    %443 = vmatpush1.msra.mxu0 %v56
    %444 = vmatprep.subr.mxu0 0.0
    %445 = vmatpush1.msra.mxu0 %v57
    %446 = vmatprep.subr.mxu0 0.0
    %447 = vmatpush1.msra.mxu0 0.0
    %448 = vmatprep.subr.mxu0 0.0
    %449 = vmatpush1.msra.mxu0 0.0
    %450 = vmatprep.subr.mxu0 0.0
    %451 = vmatpush1.msra.mxu0 0.0
    %452 = vmatprep.subr.mxu0 0.0
    %453 = vmatpush1.msra.mxu0 0.0
    %454 = vmatprep.subr.mxu0 0.0
    %455 = vmatpush1.msra.mxu0 0.0
    %456 = vmatprep.subr.mxu0 0.0
    %457 = vmatpush1.msra.mxu0 0.0
    %458 = vmatprep.subr.mxu0 0.0
    %459 = vmatpush1.msra.mxu0 0.0
    %460 = vmatprep.subr.mxu0 0.0
    %461 = vmatpush1.msra.mxu0 0.0
    %462 = vmatprep.subr.mxu0 0.0
    %463 = vmatpush1.msra.mxu0 0.0
    %464 = vmatprep.subr.mxu0 0.0
    %465 = vmatpush1.msra.mxu0 0.0
    %466 = vmatprep.subr.mxu0 0.0
    %467 = vmatpush1.msra.mxu0 0.0
    %468 = vmatprep.subr.mxu0 0.0
    %469 = vmatpush1.msra.mxu0 0.0
    %470 = vmatprep.subr.mxu0 0.0
    %471 = vmatpush1.msra.mxu0 0.0
    %472 = vmatprep.subr.mxu0 0.0
    %473 = vmatpush1.msra.mxu0 0.0
    %474 = vmatprep.subr.mxu0 0.0
    %475 = vmatpush1.msra.mxu0 0.0
    %476 = vmatprep.subr.mxu0 0.0
    %477 = vmatpush1.msra.mxu0 0.0
    %478 = vmatprep.mubr.f32.mxu0 0.0
    %479 = vmatmul.mubr.f32.gmra.mrb[0].mxu0 %v413
    %v480 = vpop.f32.mrb[0].mxu0
    %v481 = vadd.f32 0.0, %v480
    %v482 = vpop.f32.mrb[0].mxu0
    %483 = vdwg.mxu0
    %v484 = vadd.f32 %v167, %v481
    %v485 = vmul.f32 %v413, 0.7
    %v486 = vtanh.pop %v484
    %v487 = vmul.f32 %v486, 0.3
    %v488 = vadd.f32 %v485, %v487
    %489 = vmatprep.subr.mxu0 0.0
    %490 = vmatpush1.msra.mxu0 %v42
    %491 = vmatprep.subr.mxu0 0.0
    %492 = vmatpush1.msra.mxu0 %v43
    %493 = vmatprep.subr.mxu0 0.0
    %494 = vmatpush1.msra.mxu0 %v44
    %495 = vmatprep.subr.mxu0 0.0
    %496 = vmatpush1.msra.mxu0 %v45
    %497 = vmatprep.subr.mxu0 0.0
    %498 = vmatpush1.msra.mxu0 %v46
    %499 = vmatprep.subr.mxu0 0.0
    %500 = vmatpush1.msra.mxu0 %v47
    %501 = vmatprep.subr.mxu0 0.0
    %502 = vmatpush1.msra.mxu0 %v48
    %503 = vmatprep.subr.mxu0 0.0
    %504 = vmatpush1.msra.mxu0 %v49
    %505 = vmatprep.subr.mxu0 0.0
    %506 = vmatpush1.msra.mxu0 %v50
    %507 = vmatprep.subr.mxu0 0.0
    %508 = vmatpush1.msra.mxu0 %v51
    %509 = vmatprep.subr.mxu0 0.0
    %510 = vmatpush1.msra.mxu0 %v52
    %511 = vmatprep.subr.mxu0 0.0
    %512 = vmatpush1.msra.mxu0 %v53
    %513 = vmatprep.subr.mxu0 0.0
    %514 = vmatpush1.msra.mxu0 %v54
    %515 = vmatprep.subr.mxu0 0.0
    %516 = vmatpush1.msra.mxu0 %v55
    %517 = vmatprep.subr.mxu0 0.0
    %518 = vmatpush1.msra.mxu0 %v56
    %519 = vmatprep.subr.mxu0 0.0
    %520 = vmatpush1.msra.mxu0 %v57
    %521 = vmatprep.subr.mxu0 0.0
    %522 = vmatpush1.msra.mxu0 0.0
    %523 = vmatprep.subr.mxu0 0.0
    %524 = vmatpush1.msra.mxu0 0.0
    %525 = vmatprep.subr.mxu0 0.0
    %526 = vmatpush1.msra.mxu0 0.0
    %527 = vmatprep.subr.mxu0 0.0
    %528 = vmatpush1.msra.mxu0 0.0
    %529 = vmatprep.subr.mxu0 0.0
    %530 = vmatpush1.msra.mxu0 0.0
    %531 = vmatprep.subr.mxu0 0.0
    %532 = vmatpush1.msra.mxu0 0.0
    %533 = vmatprep.subr.mxu0 0.0
    %534 = vmatpush1.msra.mxu0 0.0
    %535 = vmatprep.subr.mxu0 0.0
    %536 = vmatpush1.msra.mxu0 0.0
    %537 = vmatprep.subr.mxu0 0.0
    %538 = vmatpush1.msra.mxu0 0.0
    %539 = vmatprep.subr.mxu0 0.0
    %540 = vmatpush1.msra.mxu0 0.0
    %541 = vmatprep.subr.mxu0 0.0
    %542 = vmatpush1.msra.mxu0 0.0
    %543 = vmatprep.subr.mxu0 0.0
    %544 = vmatpush1.msra.mxu0 0.0
    %545 = vmatprep.subr.mxu0 0.0
    %546 = vmatpush1.msra.mxu0 0.0
    %547 = vmatprep.subr.mxu0 0.0
    %548 = vmatpush1.msra.mxu0 0.0
    %549 = vmatprep.subr.mxu0 0.0
    %550 = vmatpush1.msra.mxu0 0.0
    %551 = vmatprep.subr.mxu0 0.0
    %552 = vmatpush1.msra.mxu0 0.0
    %553 = vmatprep.mubr.f32.mxu0 0.0
    %554 = vmatmul.mubr.f32.gmra.mrb[0].mxu0 %v488
    %v555 = vpop.f32.mrb[0].mxu0
    %v556 = vadd.f32 0.0, %v555
    %v557 = vpop.f32.mrb[0].mxu0
    %558 = vdwg.mxu0
    %v559 = vadd.f32 %v172, %v556
    %v560 = vmul.f32 %v488, 0.7
    %v561 = vtanh.pop %v559
    %v562 = vmul.f32 %v561, 0.3
    %v563 = vadd.f32 %v560, %v562
    %564 = vmatprep.subr.mxu0 0.0
    %565 = vmatpush1.msra.mxu0 %v42
    %566 = vmatprep.subr.mxu0 0.0
    %567 = vmatpush1.msra.mxu0 %v43
    %568 = vmatprep.subr.mxu0 0.0
    %569 = vmatpush1.msra.mxu0 %v44
    %570 = vmatprep.subr.mxu0 0.0
    %571 = vmatpush1.msra.mxu0 %v45
    %572 = vmatprep.subr.mxu0 0.0
    %573 = vmatpush1.msra.mxu0 %v46
    %574 = vmatprep.subr.mxu0 0.0
    %575 = vmatpush1.msra.mxu0 %v47
    %576 = vmatprep.subr.mxu0 0.0
    %577 = vmatpush1.msra.mxu0 %v48
    %578 = vmatprep.subr.mxu0 0.0
    %579 = vmatpush1.msra.mxu0 %v49
    %580 = vmatprep.subr.mxu0 0.0
    %581 = vmatpush1.msra.mxu0 %v50
    %582 = vmatprep.subr.mxu0 0.0
    %583 = vmatpush1.msra.mxu0 %v51
    %584 = vmatprep.subr.mxu0 0.0
    %585 = vmatpush1.msra.mxu0 %v52
    %586 = vmatprep.subr.mxu0 0.0
    %587 = vmatpush1.msra.mxu0 %v53
    %588 = vmatprep.subr.mxu0 0.0
    %589 = vmatpush1.msra.mxu0 %v54
    %590 = vmatprep.subr.mxu0 0.0
    %591 = vmatpush1.msra.mxu0 %v55
    %592 = vmatprep.subr.mxu0 0.0
    %593 = vmatpush1.msra.mxu0 %v56
    %594 = vmatprep.subr.mxu0 0.0
    %595 = vmatpush1.msra.mxu0 %v57
    %596 = vmatprep.subr.mxu0 0.0
    %597 = vmatpush1.msra.mxu0 0.0
    %598 = vmatprep.subr.mxu0 0.0
    %599 = vmatpush1.msra.mxu0 0.0
    %600 = vmatprep.subr.mxu0 0.0
    %601 = vmatpush1.msra.mxu0 0.0
    %602 = vmatprep.subr.mxu0 0.0
    %603 = vmatpush1.msra.mxu0 0.0
    %604 = vmatprep.subr.mxu0 0.0
    %605 = vmatpush1.msra.mxu0 0.0
    %606 = vmatprep.subr.mxu0 0.0
    %607 = vmatpush1.msra.mxu0 0.0
    %608 = vmatprep.subr.mxu0 0.0
    %609 = vmatpush1.msra.mxu0 0.0
    %610 = vmatprep.subr.mxu0 0.0
    %611 = vmatpush1.msra.mxu0 0.0
    %612 = vmatprep.subr.mxu0 0.0
    %613 = vmatpush1.msra.mxu0 0.0
    %614 = vmatprep.subr.mxu0 0.0
    %615 = vmatpush1.msra.mxu0 0.0
    %616 = vmatprep.subr.mxu0 0.0
    %617 = vmatpush1.msra.mxu0 0.0
    %618 = vmatprep.subr.mxu0 0.0
    %619 = vmatpush1.msra.mxu0 0.0
    %620 = vmatprep.subr.mxu0 0.0
    %621 = vmatpush1.msra.mxu0 0.0
    %622 = vmatprep.subr.mxu0 0.0
    %623 = vmatpush1.msra.mxu0 0.0
    %624 = vmatprep.subr.mxu0 0.0
    %625 = vmatpush1.msra.mxu0 0.0
    %626 = vmatprep.subr.mxu0 0.0
    %627 = vmatpush1.msra.mxu0 0.0
    %628 = vmatprep.mubr.f32.mxu0 0.0
    %629 = vmatmul.mubr.f32.gmra.mrb[0].mxu0 %v563
    %v630 = vpop.f32.mrb[0].mxu0
    %v631 = vadd.f32 0.0, %v630
    %v632 = vpop.f32.mrb[0].mxu0
    %633 = vdwg.mxu0
    %v634 = vadd.f32 %v177, %v631
    %v635 = vmul.f32 %v563, 0.7
    %v636 = vtanh.pop %v634
    %v637 = vmul.f32 %v636, 0.3
    %v638 = vadd.f32 %v635, %v637
    %639 = vmatprep.subr.mxu0 0.0
    %640 = vmatpush1.msra.mxu0 %v42
    %641 = vmatprep.subr.mxu0 0.0
    %642 = vmatpush1.msra.mxu0 %v43
    %643 = vmatprep.subr.mxu0 0.0
    %644 = vmatpush1.msra.mxu0 %v44
    %645 = vmatprep.subr.mxu0 0.0
    %646 = vmatpush1.msra.mxu0 %v45
    %647 = vmatprep.subr.mxu0 0.0
    %648 = vmatpush1.msra.mxu0 %v46
    %649 = vmatprep.subr.mxu0 0.0
    %650 = vmatpush1.msra.mxu0 %v47
    %651 = vmatprep.subr.mxu0 0.0
    %652 = vmatpush1.msra.mxu0 %v48
    %653 = vmatprep.subr.mxu0 0.0
    %654 = vmatpush1.msra.mxu0 %v49
    %655 = vmatprep.subr.mxu0 0.0
    %656 = vmatpush1.msra.mxu0 %v50
    %657 = vmatprep.subr.mxu0 0.0
    %658 = vmatpush1.msra.mxu0 %v51
    %659 = vmatprep.subr.mxu0 0.0
    %660 = vmatpush1.msra.mxu0 %v52
    %661 = vmatprep.subr.mxu0 0.0
    %662 = vmatpush1.msra.mxu0 %v53
    %663 = vmatprep.subr.mxu0 0.0
    %664 = vmatpush1.msra.mxu0 %v54
    %665 = vmatprep.subr.mxu0 0.0
    %666 = vmatpush1.msra.mxu0 %v55
    %667 = vmatprep.subr.mxu0 0.0
    %668 = vmatpush1.msra.mxu0 %v56
    %669 = vmatprep.subr.mxu0 0.0
    %670 = vmatpush1.msra.mxu0 %v57
    %671 = vmatprep.subr.mxu0 0.0
    %672 = vmatpush1.msra.mxu0 0.0
    %673 = vmatprep.subr.mxu0 0.0
    %674 = vmatpush1.msra.mxu0 0.0
    %675 = vmatprep.subr.mxu0 0.0
    %676 = vmatpush1.msra.mxu0 0.0
    %677 = vmatprep.subr.mxu0 0.0
    %678 = vmatpush1.msra.mxu0 0.0
    %679 = vmatprep.subr.mxu0 0.0
    %680 = vmatpush1.msra.mxu0 0.0
    %681 = vmatprep.subr.mxu0 0.0
    %682 = vmatpush1.msra.mxu0 0.0
    %683 = vmatprep.subr.mxu0 0.0
    %684 = vmatpush1.msra.mxu0 0.0
    %685 = vmatprep.subr.mxu0 0.0
    %686 = vmatpush1.msra.mxu0 0.0
    %687 = vmatprep.subr.mxu0 0.0
    %688 = vmatpush1.msra.mxu0 0.0
    %689 = vmatprep.subr.mxu0 0.0
    %690 = vmatpush1.msra.mxu0 0.0
    %691 = vmatprep.subr.mxu0 0.0
    %692 = vmatpush1.msra.mxu0 0.0
    %693 = vmatprep.subr.mxu0 0.0
    %694 = vmatpush1.msra.mxu0 0.0
    %695 = vmatprep.subr.mxu0 0.0
    %696 = vmatpush1.msra.mxu0 0.0
    %697 = vmatprep.subr.mxu0 0.0
    %698 = vmatpush1.msra.mxu0 0.0
    %699 = vmatprep.subr.mxu0 0.0
    %700 = vmatpush1.msra.mxu0 0.0
    %701 = vmatprep.subr.mxu0 0.0
    %702 = vmatpush1.msra.mxu0 0.0
    %703 = vmatprep.mubr.f32.mxu0 0.0
    %704 = vmatmul.mubr.f32.gmra.mrb[0].mxu0 %v638
    %v705 = vpop.f32.mrb[0].mxu0
    %v706 = vadd.f32 0.0, %v705
    %v707 = vpop.f32.mrb[0].mxu0
    %708 = vdwg.mxu0
    %v709 = vadd.f32 %v182, %v706
    %v710 = vmul.f32 %v638, 0.7
    %v711 = vtanh.pop %v709
    %v712 = vmul.f32 %v711, 0.3
    %v713 = vadd.f32 %v710, %v712
    %714 = vmatprep.subr.mxu0 0.0
    %715 = vmatpush1.msra.mxu0 %v42
    %716 = vmatprep.subr.mxu0 0.0
    %717 = vmatpush1.msra.mxu0 %v43
    %718 = vmatprep.subr.mxu0 0.0
    %719 = vmatpush1.msra.mxu0 %v44
    %720 = vmatprep.subr.mxu0 0.0
    %721 = vmatpush1.msra.mxu0 %v45
    %722 = vmatprep.subr.mxu0 0.0
    %723 = vmatpush1.msra.mxu0 %v46
    %724 = vmatprep.subr.mxu0 0.0
    %725 = vmatpush1.msra.mxu0 %v47
    %726 = vmatprep.subr.mxu0 0.0
    %727 = vmatpush1.msra.mxu0 %v48
    %728 = vmatprep.subr.mxu0 0.0
    %729 = vmatpush1.msra.mxu0 %v49
    %730 = vmatprep.subr.mxu0 0.0
    %731 = vmatpush1.msra.mxu0 %v50
    %732 = vmatprep.subr.mxu0 0.0
    %733 = vmatpush1.msra.mxu0 %v51
    %734 = vmatprep.subr.mxu0 0.0
    %735 = vmatpush1.msra.mxu0 %v52
    %736 = vmatprep.subr.mxu0 0.0
    %737 = vmatpush1.msra.mxu0 %v53
    %738 = vmatprep.subr.mxu0 0.0
    %739 = vmatpush1.msra.mxu0 %v54
    %740 = vmatprep.subr.mxu0 0.0
    %741 = vmatpush1.msra.mxu0 %v55
    %742 = vmatprep.subr.mxu0 0.0
    %743 = vmatpush1.msra.mxu0 %v56
    %744 = vmatprep.subr.mxu0 0.0
    %745 = vmatpush1.msra.mxu0 %v57
    %746 = vmatprep.subr.mxu0 0.0
    %747 = vmatpush1.msra.mxu0 0.0
    %748 = vmatprep.subr.mxu0 0.0
    %749 = vmatpush1.msra.mxu0 0.0
    %750 = vmatprep.subr.mxu0 0.0
    %751 = vmatpush1.msra.mxu0 0.0
    %752 = vmatprep.subr.mxu0 0.0
    %753 = vmatpush1.msra.mxu0 0.0
    %754 = vmatprep.subr.mxu0 0.0
    %755 = vmatpush1.msra.mxu0 0.0
    %756 = vmatprep.subr.mxu0 0.0
    %757 = vmatpush1.msra.mxu0 0.0
    %758 = vmatprep.subr.mxu0 0.0
    %759 = vmatpush1.msra.mxu0 0.0
    %760 = vmatprep.subr.mxu0 0.0
    %761 = vmatpush1.msra.mxu0 0.0
    %762 = vmatprep.subr.mxu0 0.0
    %763 = vmatpush1.msra.mxu0 0.0
    %764 = vmatprep.subr.mxu0 0.0
    %765 = vmatpush1.msra.mxu0 0.0
    %766 = vmatprep.subr.mxu0 0.0
    %767 = vmatpush1.msra.mxu0 0.0
    %768 = vmatprep.subr.mxu0 0.0
    %769 = vmatpush1.msra.mxu0 0.0
    %770 = vmatprep.subr.mxu0 0.0
    %771 = vmatpush1.msra.mxu0 0.0
    %772 = vmatprep.subr.mxu0 0.0
    %773 = vmatpush1.msra.mxu0 0.0
    %774 = vmatprep.subr.mxu0 0.0
    %775 = vmatpush1.msra.mxu0 0.0
    %776 = vmatprep.subr.mxu0 0.0
    %777 = vmatpush1.msra.mxu0 0.0
    %778 = vmatprep.mubr.f32.mxu0 0.0
    %779 = vmatmul.mubr.f32.gmra.mrb[0].mxu0 %v713
    %v780 = vpop.f32.mrb[0].mxu0
    %v781 = vadd.f32 0.0, %v780
    %v782 = vpop.f32.mrb[0].mxu0
    %783 = vdwg.mxu0
    %v784 = vadd.f32 %v187, %v781
    %v785 = vmul.f32 %v713, 0.7
    %v786 = vtanh.pop %v784
    %v787 = vmul.f32 %v786, 0.3
    %v788 = vadd.f32 %v785, %v787
    %v789 = vlaneseq
    %v790 = vshrl.u32 %v789, 7
    %v791 = vsub.s32 0, %v790
    %v792 = vrot.slane %v76, %v791
    %793 = vmatprep.subr.mxu0 0.0
    %794 = vmatpush1.msra.mxu0 %v59
    %795 = vmatprep.subr.mxu0 0.0
    %796 = vmatpush1.msra.mxu0 %v60
    %797 = vmatprep.subr.mxu0 0.0
    %798 = vmatpush1.msra.mxu0 %v61
    %799 = vmatprep.subr.mxu0 0.0
    %800 = vmatpush1.msra.mxu0 %v62
    %801 = vmatprep.subr.mxu0 0.0
    %802 = vmatpush1.msra.mxu0 %v63
    %803 = vmatprep.subr.mxu0 0.0
    %804 = vmatpush1.msra.mxu0 %v64
    %805 = vmatprep.subr.mxu0 0.0
    %806 = vmatpush1.msra.mxu0 %v65
    %807 = vmatprep.subr.mxu0 0.0
    %808 = vmatpush1.msra.mxu0 %v66
    %809 = vmatprep.subr.mxu0 0.0
    %810 = vmatpush1.msra.mxu0 %v67
    %811 = vmatprep.subr.mxu0 0.0
    %812 = vmatpush1.msra.mxu0 %v68
    %813 = vmatprep.subr.mxu0 0.0
    %814 = vmatpush1.msra.mxu0 %v69
    %815 = vmatprep.subr.mxu0 0.0
    %816 = vmatpush1.msra.mxu0 %v70
    %817 = vmatprep.subr.mxu0 0.0
    %818 = vmatpush1.msra.mxu0 %v71
    %819 = vmatprep.subr.mxu0 0.0
    %820 = vmatpush1.msra.mxu0 %v72
    %821 = vmatprep.subr.mxu0 0.0
    %822 = vmatpush1.msra.mxu0 %v73
    %823 = vmatprep.subr.mxu0 0.0
    %824 = vmatpush1.msra.mxu0 %v74
    %825 = vmatprep.subr.mxu0 0.0
    %826 = vmatpush1.msra.mxu0 0.0
    %827 = vmatprep.subr.mxu0 0.0
    %828 = vmatpush1.msra.mxu0 0.0
    %829 = vmatprep.subr.mxu0 0.0
    %830 = vmatpush1.msra.mxu0 0.0
    %831 = vmatprep.subr.mxu0 0.0
    %832 = vmatpush1.msra.mxu0 0.0
    %833 = vmatprep.subr.mxu0 0.0
    %834 = vmatpush1.msra.mxu0 0.0
    %835 = vmatprep.subr.mxu0 0.0
    %836 = vmatpush1.msra.mxu0 0.0
    %837 = vmatprep.subr.mxu0 0.0
    %838 = vmatpush1.msra.mxu0 0.0
    %839 = vmatprep.subr.mxu0 0.0
    %840 = vmatpush1.msra.mxu0 0.0
    %841 = vmatprep.subr.mxu0 0.0
    %842 = vmatpush1.msra.mxu0 0.0
    %843 = vmatprep.subr.mxu0 0.0
    %844 = vmatpush1.msra.mxu0 0.0
    %845 = vmatprep.subr.mxu0 0.0
    %846 = vmatpush1.msra.mxu0 0.0
    %847 = vmatprep.subr.mxu0 0.0
    %848 = vmatpush1.msra.mxu0 0.0
    %849 = vmatprep.subr.mxu0 0.0
    %850 = vmatpush1.msra.mxu0 0.0
    %851 = vmatprep.subr.mxu0 0.0
    %852 = vmatpush1.msra.mxu0 0.0
    %853 = vmatprep.subr.mxu0 0.0
    %854 = vmatpush1.msra.mxu0 0.0
    %855 = vmatprep.subr.mxu0 0.0
    %856 = vmatpush1.msra.mxu0 0.0
    %857 = vmatprep.mubr.f32.mxu0 0.0
    %858 = vmatmul.mubr.f32.gmra.mrb[0].mxu0 %v788
    %v859 = vpop.f32.mrb[0].mxu0
    %v860 = vadd.f32 %v792, %v859
    %v861 = vpop.f32.mrb[0].mxu0
    %862 = vdwg.mxu0
    %863 = vst [vmem:[%s2] sm:$0xff] %v860
    // Predicated region
    $region14: #{rc_model_forward.1} parent=1 // pred_check
      _
    $region15: #{rc_model_forward.1} parent=1 // pred_check_branch
      %865 = sbr.rel (0) target = $region17
    $region16: #{rc_model_forward.1} parent=1 // pred_region
      _
    $region17: #{rc_model_forward.1} parent=1 // pred_fallthru
      _
    // Predicated region
    $region18: #{rc_model_forward.1} parent=1 // pred_check
      _
    $region19: #{rc_model_forward.1} parent=1 // pred_check_branch
      %867 = sbr.rel (0) target = $region21
    $region20: #{rc_model_forward.1} parent=1 // pred_region
      _
    $region21: #{rc_model_forward.1} parent=1 // pred_fallthru
      _
    %868 = vsyncpa [#allocation3], 1

</llo_original>
